<compile_context>
chip_gen: v5e
topology: v5e:2x2
jax: 0.10.0
libtpu: 0.0.40
codegen_flags: <defaults>
</compile_context>

<pallas_src>
import jax
import jax.numpy as jnp
from jax import lax
from jax.experimental import pallas as pl
from jax.experimental.pallas import tpu as pltpu


_LANE = 128  # TPU lane width: pad feature dims to multiples of this.


def _round_up(v, m):
    return ((v + m - 1) // m) * m


# Kernel-side activations (sigmoid uses EUP exp + approx reciprocal -> no VPU divide).
def _kernel_act(name):
    if name == "relu":
        return lambda h: jnp.maximum(h, 0.0)
    if name == "sigmoid":
        return lambda h: pl.reciprocal(1.0 + jnp.exp(-h), approx=True)
    if name == "tanh":
        return jnp.tanh
    if name == "linear":
        return lambda h: h
    raise ValueError(f"unknown activation: {name}")


# Reference-side (plain JAX) activations.
_REF_ACTS = {
    "relu": lambda h: jnp.maximum(h, 0.0),
    "sigmoid": jax.nn.sigmoid,
    "tanh": jnp.tanh,
    "linear": lambda h: h,
}


def _make_mlp_kernel(num_mid, activation_hidden, activation_output, unroll_mid):
    """Pallas kernel computing the full MLP for one (tb, f_in_pad) batch tile."""
    act_h = _kernel_act(activation_hidden)
    act_o = _kernel_act(activation_output)

    def kernel(x_ref, w_first_ref, b_first_ref, *refs):
        if num_mid > 0:
            w_mid_ref, b_mid_ref, w_last_ref, b_last_ref, out_ref = refs
        else:
            w_last_ref, b_last_ref, out_ref = refs

        # Layer 0: bf16 MXU matmul, f32 accumulate, f32 bias + activation.
        h = jnp.dot(x_ref[...].astype(jnp.bfloat16), w_first_ref[...],
                    preferred_element_type=jnp.float32) + b_first_ref[...]
        h = act_h(h)

        # Hidden -> hidden layers over the stacked [M, N, N] weights.
        if num_mid > 0:
            def layer(li, hh):
                hh = jnp.dot(hh.astype(jnp.bfloat16), w_mid_ref[li],
                             preferred_element_type=jnp.float32) + b_mid_ref[li]
                return act_h(hh)

            if unroll_mid:
                for li in range(num_mid):
                    h = layer(li, h)
            else:
                h = lax.fori_loop(0, num_mid, layer, h)

        # Final [N,1] projection as a transposed matmul (q @ k^T pattern):
        #   w_last_ref: (8, n_pad) bf16 (row 0 = real weights, rows 1..7 zero)
        #   h         : (tb, n_pad) -> contraction over the last dims
        # giving an (8, tb) result; keep row 0 -> lane-dense (1, tb) output row.
        out8 = lax.dot_general(w_last_ref[...], h.astype(jnp.bfloat16),
                               dimension_numbers=(((1,), (1,)), ((), ())),
                               preferred_element_type=jnp.float32)
        row = out8[0:1, :] + b_last_ref[...]          # (1, tb) + (1, 1)
        out_ref[...] = act_o(row).reshape(out_ref.shape).astype(out_ref.dtype)

    return kernel


def dense_model_forward(x, params, activation_hidden="relu",
                        activation_output="linear", block_b=1024):
    """DenseModel forward pass as a single batch-gridded Pallas kernel.

    x:      [B, input_size] float32
    params: list of (W, b) with W: [F_in, F_out] f32, b: [1, F_out] f32
            (W is stored transposed vs. torch's [out, in]).
    returns [B, 1] float32
    """
    num_layers = len(params)
    assert num_layers >= 2, "DenseModel always has at least 2 Linear layers"
    B, f_in = x.shape
    n_hidden = params[0][0].shape[1]
    out_features = params[-1][0].shape[1]
    assert out_features == 1, "DenseModel's final Linear always has 1 output"
    assert params[-1][0].shape[0] == n_hidden
    num_mid = num_layers - 2
    for (w, _) in params[1:-1]:
        assert w.shape == (n_hidden, n_hidden), "equal-width hidden layers expected"

    # ---- Batch tiling: multiple of 16 rows (bf16 sublane packing), >= 2 tiles so
    # the "parallel" batch axis can shard across both TensorCores on v7x.
    tb = min(_round_up(block_b, 16), _round_up(B, 16))
    if _round_up(B, tb) // tb < 2 and tb >= 32:
        tb = _round_up(tb // 2, 16)
    b_pad = _round_up(B, tb)
    num_tiles = b_pad // tb

    # ---- Lane padding of feature dims (exactness: padded weights/biases are zero,
    # so padded hidden units contribute nothing even for sigmoid/tanh, because the
    # *next* layer's padded weight rows are zero).
    f_in_pad = _round_up(f_in, _LANE)
    n_pad = _round_up(n_hidden, _LANE)

    x_p = jnp.pad(x, ((0, b_pad - B), (0, f_in_pad - f_in)))

    w_first = jnp.pad(params[0][0],
                      ((0, f_in_pad - f_in), (0, n_pad - n_hidden))).astype(jnp.bfloat16)
    b_first = jnp.pad(params[0][1].reshape(1, n_hidden),
                      ((0, 0), (0, n_pad - n_hidden))).astype(jnp.float32)

    w_mid_size = b_mid_size = 0
    w_mid = b_mid = None
    if num_mid > 0:
        w_mid = jnp.stack([jnp.pad(w, ((0, n_pad - n_hidden), (0, n_pad - n_hidden)))
                           for (w, _) in params[1:-1]]).astype(jnp.bfloat16)
        b_mid = jnp.stack([jnp.pad(b.reshape(1, n_hidden), ((0, 0), (0, n_pad - n_hidden)))
                           for (_, b) in params[1:-1]]).astype(jnp.float32)
        w_mid_size, b_mid_size = w_mid.size, b_mid.size

    # Last layer stored as a (8, n_pad) row block (row 0 real, rest zero) so the
    # transposed matmul has a sublane-aligned M=8.
    w_last = jnp.pad(params[-1][0].T,
                     ((0, 8 - out_features), (0, n_pad - n_hidden))).astype(jnp.bfloat16)
    b_last = params[-1][1].reshape(1, 1).astype(jnp.float32)

    flat_args = [x_p, w_first, b_first]
    if num_mid > 0:
        flat_args += [w_mid, b_mid]
    flat_args += [w_last, b_last]

    # ---- Advisory cost estimate (padded dims = actual work performed).
    flops = 2 * b_pad * (f_in_pad * n_pad + num_mid * n_pad * n_pad + 8 * n_pad)
    uses_eup = (activation_hidden in ("sigmoid", "tanh")
                or activation_output in ("sigmoid", "tanh"))
    transc = b_pad * n_pad * (num_layers - 1) if uses_eup else 0
    weight_bytes = (2 * (w_first.size + w_mid_size + w_last.size)
                    + 4 * (b_first.size + b_mid_size + b_last.size))
    bytes_accessed = int(weight_bytes + b_pad * f_in_pad * 4 + b_pad * 4)

    # ---- Per-generation VMEM budget: capacity minus headroom; account for
    # (possibly double-buffered) resident weights, streamed x/out tiles and the
    # live f32/bf16 intermediates of one layer.
    try:
        vmem_capacity = pltpu.get_tpu_info().vmem_capacity_bytes
    except Exception:
        vmem_capacity = 64 << 20  # conservative: v7x per-TC VMEM
    vmem_cap = vmem_capacity - max(8 << 20, vmem_capacity // 8)
    vmem_needed = (2 * weight_bytes                    # assume 2 buffers (worst case)
                   + 2 * tb * f_in_pad * 4             # double-buffered x tiles
                   + 2 * tb * 4                        # double-buffered out rows
                   + tb * n_pad * 12                   # live h (f32 in/out + bf16 cast)
                   + (2 << 20))                        # compiler internal scratch
    vmem_limit = int(min(vmem_cap, max(vmem_needed, 32 << 20)))

    unroll_mid = num_mid <= 4
    kernel = _make_mlp_kernel(num_mid, activation_hidden, activation_output, unroll_mid)

    def _call(single_buffer_weights):
        def wspec(shape, idx):
            # Constant index_map -> weights are VMEM-resident; request a single
            # buffer so they are not silently double-buffered.
            if single_buffer_weights:
                return pl.BlockSpec(shape, idx, pipeline_mode=pl.Buffered(1))
            return pl.BlockSpec(shape, idx)

        in_specs = [
            pl.BlockSpec((tb, f_in_pad), lambda i: (i, 0)),   # streamed batch tile
            wspec(w_first.shape, lambda i: (0, 0)),
            wspec(b_first.shape, lambda i: (0, 0)),
        ]
        if num_mid > 0:
            in_specs += [
                wspec(w_mid.shape, lambda i: (0, 0, 0)),
                wspec(b_mid.shape, lambda i: (0, 0, 0)),
            ]
        in_specs += [
            wspec(w_last.shape, lambda i: (0, 0)),
            wspec(b_last.shape, lambda i: (0, 0)),
        ]

        return pl.pallas_call(
            kernel,
            out_shape=jax.ShapeDtypeStruct((num_tiles, 1, tb), jnp.float32),
            grid=(num_tiles,),
            in_specs=in_specs,
            out_specs=pl.BlockSpec((1, 1, tb), lambda i: (i, 0, 0)),
            compiler_params=pltpu.CompilerParams(
                dimension_semantics=("parallel",),    # batch tiles are independent
                vmem_limit_bytes=vmem_limit),
            cost_estimate=pl.CostEstimate(flops=int(flops), transcendentals=int(transc),
                                          bytes_accessed=bytes_accessed),
        )(*flat_args)

    try:
        out = _call(True)           # single-buffered resident weights
    except Exception:
        out = _call(False)          # fallback: default (double) buffering

    # (num_tiles, 1, tb) -> (b_pad, 1); slice batch padding off.
    return out.reshape(b_pad, 1)[:B]


def init_dense_model_params(key, input_size, hidden_layers, neurons_per_layer):
    """Deterministic parameter init matching DenseModel.__init__ shapes (f32)."""
    sizes = [input_size] + [neurons_per_layer] * hidden_layers + [1]
    params = []
    for i in range(len(sizes) - 1):
        f_i, f_o = sizes[i], sizes[i + 1]
        key, kw, kb = jax.random.split(key, 3)
        bound = 1.0 / jnp.sqrt(jnp.float32(f_i))   # ~ torch nn.Linear default
        W = jax.random.uniform(kw, (f_i, f_o), jnp.float32, -bound, bound)
        b = jax.random.uniform(kb, (1, f_o), jnp.float32, -bound, bound)
        params.append((W, b))
    return params


def _reference_forward(x, params, activation_hidden="relu",
                       activation_output="linear", use_bf16=True):
    """Pure-JAX reference; use_bf16=True reproduces the kernel's matmul numerics."""
    h = x.astype(jnp.float32)
    n = len(params)
    for i, (w, b) in enumerate(params):
        if use_bf16:
            h = jnp.dot(h.astype(jnp.bfloat16), w.astype(jnp.bfloat16),
                        preferred_element_type=jnp.float32)
        else:
            h = jnp.dot(h, w)
        h = h + b.reshape(1, -1).astype(jnp.float32)
        act = activation_hidden if i < n - 1 else activation_output
        h = _REF_ACTS[act](h)
    return h


if __name__ == "__main__":
    # Small shapes: batch=20, input_size=32, hidden_layers=2, neurons_per_layer=32.
    # block_b=16 gives a 2-step batch grid (tb=16, b_pad=32) and exercises padding.
    B, INPUT_SIZE, HIDDEN_LAYERS, NEURONS = 20, 32, 2, 32

    key = jax.random.PRNGKey(0)
    key, kx = jax.random.split(key)
    x = jax.random.normal(kx, (B, INPUT_SIZE), jnp.float32)

    params = init_dense_model_params(key, INPUT_SIZE, HIDDEN_LAYERS, NEURONS)

    out = dense_model_forward(x, params, activation_hidden="relu",
                              activation_output="linear", block_b=16)
    out = jax.block_until_ready(out)

    ref_bf16 = _reference_forward(x, params, use_bf16=True)   # same numerics
    ref_f32 = _reference_forward(x, params, use_bf16=False)   # torch-like f32

    assert out.shape == (B, 1), out.shape
    assert jnp.allclose(out, ref_bf16, atol=1e-4, rtol=1e-4), (out, ref_bf16)
    assert jnp.allclose(out, ref_f32, atol=5e-2, rtol=5e-2), (out, ref_f32)

    print("KERNEL_OK")
</pallas_src>

<mosaic_0001>
module attributes {stable_mosaic.version = 11 : i64} {
  func.func @kernel(%arg0: i32, %arg1: memref<16x128xf32, #tpu.memory_space<vmem>>, %arg2: memref<128x128xbf16, #tpu.memory_space<vmem>>, %arg3: memref<1x128xf32, #tpu.memory_space<vmem>>, %arg4: memref<1x128x128xbf16, #tpu.memory_space<vmem>>, %arg5: memref<1x1x128xf32, #tpu.memory_space<vmem>>, %arg6: memref<8x128xbf16, #tpu.memory_space<vmem>>, %arg7: memref<1x1xf32, #tpu.memory_space<vmem>>, %arg8: memref<1x1x16xf32, #tpu.memory_space<vmem>>) attributes {dimension_semantics = [#tpu.dimension_semantics<parallel>], iteration_bounds = array<i64: 2>, scalar_prefetch = 0 : i64, scratch_operands = 0 : i64, tpu.core_type = #tpu.core_type<tc>, window_params = [{transform_indices = @transform_0, window_bounds = array<i64: 16, 128>}, {pipeline_mode = #tpu.pipeline_mode<synchronous>, transform_indices = @transform_1, window_bounds = array<i64: 128, 128>}, {pipeline_mode = #tpu.pipeline_mode<synchronous>, transform_indices = @transform_2, window_bounds = array<i64: 1, 128>}, {pipeline_mode = #tpu.pipeline_mode<synchronous>, transform_indices = @transform_3, window_bounds = array<i64: 1, 128, 128>}, {pipeline_mode = #tpu.pipeline_mode<synchronous>, transform_indices = @transform_4, window_bounds = array<i64: 1, 1, 128>}, {pipeline_mode = #tpu.pipeline_mode<synchronous>, transform_indices = @transform_5, window_bounds = array<i64: 8, 128>}, {pipeline_mode = #tpu.pipeline_mode<synchronous>, transform_indices = @transform_6, window_bounds = array<i64: 1, 1>}, {transform_indices = @transform_7, window_bounds = array<i64: 1, 1, 16>}]} {
    %c0 = arith.constant 0 : index
    %c0_0 = arith.constant 0 : index
    %0 = vector.load %arg1[%c0, %c0_0] : memref<16x128xf32, #tpu.memory_space<vmem>>, vector<16x128xf32>
    %1 = arith.truncf %0 : vector<16x128xf32> to vector<16x128xbf16>
    %c0_1 = arith.constant 0 : index
    %c0_2 = arith.constant 0 : index
    %2 = vector.load %arg2[%c0_1, %c0_2] : memref<128x128xbf16, #tpu.memory_space<vmem>>, vector<128x128xbf16>
    %cst = arith.constant dense<0.000000e+00> : vector<16x128xf32>
    %3 = tpu.matmul %1, %2, %cst {dimension_numbers = #tpu.dot_dimension_numbers<[1], [0], [0], [1], [0, 0, 1, 1], [], []>} : vector<16x128xbf16>, vector<128x128xbf16>, vector<16x128xf32> -> vector<16x128xf32>
    %c0_3 = arith.constant 0 : index
    %c0_4 = arith.constant 0 : index
    %4 = vector.load %arg3[%c0_3, %c0_4] : memref<1x128xf32, #tpu.memory_space<vmem>>, vector<1x128xf32>
    %5 = vector.broadcast %4 : vector<1x128xf32> to vector<16x128xf32>
    %6 = arith.addf %3, %5 : vector<16x128xf32>
    %cst_5 = arith.constant 0.000000e+00 : f32
    %7 = vector.broadcast %cst_5 : f32 to vector<16x128xf32>
    %8 = arith.maximumf %6, %7 : vector<16x128xf32>
    %9 = arith.truncf %8 : vector<16x128xf32> to vector<16x128xbf16>
    %c0_6 = arith.constant 0 : index
    %c0_7 = arith.constant 0 : index
    %c0_8 = arith.constant 0 : index
    %10 = vector.load %arg4[%c0_6, %c0_7, %c0_8] : memref<1x128x128xbf16, #tpu.memory_space<vmem>>, vector<1x128x128xbf16>
    %11 = vector.shape_cast %10 : vector<1x128x128xbf16> to vector<128x128xbf16>
    %cst_9 = arith.constant dense<0.000000e+00> : vector<16x128xf32>
    %12 = tpu.matmul %9, %11, %cst_9 {dimension_numbers = #tpu.dot_dimension_numbers<[1], [0], [0], [1], [0, 0, 1, 1], [], []>} : vector<16x128xbf16>, vector<128x128xbf16>, vector<16x128xf32> -> vector<16x128xf32>
    %c0_10 = arith.constant 0 : index
    %c0_11 = arith.constant 0 : index
    %c0_12 = arith.constant 0 : index
    %13 = vector.load %arg5[%c0_10, %c0_11, %c0_12] : memref<1x1x128xf32, #tpu.memory_space<vmem>>, vector<1x1x128xf32>
    %14 = vector.shape_cast %13 : vector<1x1x128xf32> to vector<1x128xf32>
    %15 = vector.broadcast %14 : vector<1x128xf32> to vector<16x128xf32>
    %16 = arith.addf %12, %15 : vector<16x128xf32>
    %cst_13 = arith.constant 0.000000e+00 : f32
    %17 = vector.broadcast %cst_13 : f32 to vector<16x128xf32>
    %18 = arith.maximumf %16, %17 : vector<16x128xf32>
    %c0_14 = arith.constant 0 : index
    %c0_15 = arith.constant 0 : index
    %19 = vector.load %arg6[%c0_14, %c0_15] : memref<8x128xbf16, #tpu.memory_space<vmem>>, vector<8x128xbf16>
    %20 = arith.truncf %18 : vector<16x128xf32> to vector<16x128xbf16>
    %cst_16 = arith.constant dense<0.000000e+00> : vector<8x16xf32>
    %21 = tpu.matmul %19, %20, %cst_16 {dimension_numbers = #tpu.dot_dimension_numbers<[1], [1], [0], [0], [0, 0, 1, 0], [], []>} : vector<8x128xbf16>, vector<16x128xbf16>, vector<8x16xf32> -> vector<8x16xf32>
    %22 = vector.extract_strided_slice %21 {offsets = [0, 0], sizes = [1, 16], strides = [1, 1]} : vector<8x16xf32> to vector<1x16xf32>
    %c0_17 = arith.constant 0 : index
    %c0_18 = arith.constant 0 : index
    %23 = vector.load %arg7[%c0_17, %c0_18] : memref<1x1xf32, #tpu.memory_space<vmem>>, vector<1x1xf32>
    %24 = vector.broadcast %23 : vector<1x1xf32> to vector<1x16xf32>
    %25 = arith.addf %22, %24 : vector<1x16xf32>
    %26 = vector.shape_cast %25 : vector<1x16xf32> to vector<1x1x16xf32>
    %c0_19 = arith.constant 0 : index
    %c0_20 = arith.constant 0 : index
    %c0_21 = arith.constant 0 : index
    %27 = vector.load %arg8[%c0_19, %c0_20, %c0_21] : memref<1x1x16xf32, #tpu.memory_space<vmem>>, vector<1x1x16xf32>
    tpu.vector_store %arg8[%c0_19, %c0_20, %c0_21], %26 {strides = array<i32>} : memref<1x1x16xf32, #tpu.memory_space<vmem>>, vector<1x1x16xf32>,
    return
  }
  func.func @transform_0(%arg0: i32) -> (i32, i32) {
    %c0_i32 = arith.constant 0 : i32
    %c0_i32_0 = arith.constant 0 : i32
    return %arg0, %c0_i32 : i32, i32
  }
  func.func @transform_1(%arg0: i32) -> (i32, i32) {
    %c0_i32 = arith.constant 0 : i32
    %c0_i32_0 = arith.constant 0 : i32
    %c0_i32_1 = arith.constant 0 : i32
    return %c0_i32, %c0_i32_0 : i32, i32
  }
  func.func @transform_2(%arg0: i32) -> (i32, i32) {
    %c0_i32 = arith.constant 0 : i32
    %c0_i32_0 = arith.constant 0 : i32
    %c0_i32_1 = arith.constant 0 : i32
    return %c0_i32, %c0_i32_0 : i32, i32
  }
  func.func @transform_3(%arg0: i32) -> (i32, i32, i32) {
    %c0_i32 = arith.constant 0 : i32
    %c0_i32_0 = arith.constant 0 : i32
    %c0_i32_1 = arith.constant 0 : i32
    %c0_i32_2 = arith.constant 0 : i32
    return %c0_i32, %c0_i32_0, %c0_i32_1 : i32, i32, i32
  }
  func.func @transform_4(%arg0: i32) -> (i32, i32, i32) {
    %c0_i32 = arith.constant 0 : i32
    %c0_i32_0 = arith.constant 0 : i32
    %c0_i32_1 = arith.constant 0 : i32
    %c0_i32_2 = arith.constant 0 : i32
    return %c0_i32, %c0_i32_0, %c0_i32_1 : i32, i32, i32
  }
  func.func @transform_5(%arg0: i32) -> (i32, i32) {
    %c0_i32 = arith.constant 0 : i32
    %c0_i32_0 = arith.constant 0 : i32
    %c0_i32_1 = arith.constant 0 : i32
    return %c0_i32, %c0_i32_0 : i32, i32
  }
  func.func @transform_6(%arg0: i32) -> (i32, i32) {
    %c0_i32 = arith.constant 0 : i32
    %c0_i32_0 = arith.constant 0 : i32
    %c0_i32_1 = arith.constant 0 : i32
    return %c0_i32, %c0_i32_0 : i32, i32
  }
  func.func @transform_7(%arg0: i32) -> (i32, i32, i32) {
    %c0_i32 = arith.constant 0 : i32
    %c0_i32_0 = arith.constant 0 : i32
    %c0_i32_1 = arith.constant 0 : i32
    return %arg0, %c0_i32, %c0_i32_0 : i32, i32, i32
  }
}

module attributes {stable_mosaic.version = 11 : i64} {
  func.func @kernel(%arg0: i32, %arg1: memref<16x128xf32, #tpu.memory_space<vmem>>, %arg2: memref<128x128xbf16, #tpu.memory_space<vmem>>, %arg3: memref<1x128xf32, #tpu.memory_space<vmem>>, %arg4: memref<1x128x128xbf16, #tpu.memory_space<vmem>>, %arg5: memref<1x1x128xf32, #tpu.memory_space<vmem>>, %arg6: memref<8x128xbf16, #tpu.memory_space<vmem>>, %arg7: memref<1x1xf32, #tpu.memory_space<vmem>>, %arg8: memref<1x1x16xf32, #tpu.memory_space<vmem>>) attributes {dimension_semantics = [#tpu.dimension_semantics<parallel>], iteration_bounds = array<i64: 2>, scalar_prefetch = 0 : i64, scratch_operands = 0 : i64, tpu.core_type = #tpu.core_type<tc>, window_params = [{transform_indices = @transform_0, window_bounds = array<i64: 16, 128>}, {pipeline_mode = #tpu.pipeline_mode<synchronous>, transform_indices = @transform_1, window_bounds = array<i64: 128, 128>}, {pipeline_mode = #tpu.pipeline_mode<synchronous>, transform_indices = @transform_2, window_bounds = array<i64: 1, 128>}, {pipeline_mode = #tpu.pipeline_mode<synchronous>, transform_indices = @transform_3, window_bounds = array<i64: 1, 128, 128>}, {pipeline_mode = #tpu.pipeline_mode<synchronous>, transform_indices = @transform_4, window_bounds = array<i64: 1, 1, 128>}, {pipeline_mode = #tpu.pipeline_mode<synchronous>, transform_indices = @transform_5, window_bounds = array<i64: 8, 128>}, {pipeline_mode = #tpu.pipeline_mode<synchronous>, transform_indices = @transform_6, window_bounds = array<i64: 1, 1>}, {transform_indices = @transform_7, window_bounds = array<i64: 1, 1, 16>}]} {
    %c0 = arith.constant 0 : index
    %c0_0 = arith.constant 0 : index
    %0 = vector.load %arg1[%c0, %c0_0] : memref<16x128xf32, #tpu.memory_space<vmem>>, vector<16x128xf32>
    %1 = arith.truncf %0 : vector<16x128xf32> to vector<16x128xbf16>
    %c0_1 = arith.constant 0 : index
    %c0_2 = arith.constant 0 : index
    %2 = vector.load %arg2[%c0_1, %c0_2] : memref<128x128xbf16, #tpu.memory_space<vmem>>, vector<128x128xbf16>
    %cst = arith.constant dense<0.000000e+00> : vector<16x128xf32>
    %3 = tpu.matmul %1, %2, %cst {dimension_numbers = #tpu.dot_dimension_numbers<[1], [0], [0], [1], [0, 0, 1, 1], [], []>} : vector<16x128xbf16>, vector<128x128xbf16>, vector<16x128xf32> -> vector<16x128xf32>
    %c0_3 = arith.constant 0 : index
    %c0_4 = arith.constant 0 : index
    %4 = vector.load %arg3[%c0_3, %c0_4] : memref<1x128xf32, #tpu.memory_space<vmem>>, vector<1x128xf32>
    %5 = vector.broadcast %4 : vector<1x128xf32> to vector<16x128xf32>
    %6 = arith.addf %3, %5 : vector<16x128xf32>
    %cst_5 = arith.constant 0.000000e+00 : f32
    %7 = vector.broadcast %cst_5 : f32 to vector<16x128xf32>
    %8 = arith.maximumf %6, %7 : vector<16x128xf32>
    %9 = arith.truncf %8 : vector<16x128xf32> to vector<16x128xbf16>
    %c0_6 = arith.constant 0 : index
    %c0_7 = arith.constant 0 : index
    %c0_8 = arith.constant 0 : index
    %10 = vector.load %arg4[%c0_6, %c0_7, %c0_8] : memref<1x128x128xbf16, #tpu.memory_space<vmem>>, vector<1x128x128xbf16>
    %11 = vector.shape_cast %10 : vector<1x128x128xbf16> to vector<128x128xbf16>
    %cst_9 = arith.constant dense<0.000000e+00> : vector<16x128xf32>
    %12 = tpu.matmul %9, %11, %cst_9 {dimension_numbers = #tpu.dot_dimension_numbers<[1], [0], [0], [1], [0, 0, 1, 1], [], []>} : vector<16x128xbf16>, vector<128x128xbf16>, vector<16x128xf32> -> vector<16x128xf32>
    %c0_10 = arith.constant 0 : index
    %c0_11 = arith.constant 0 : index
    %c0_12 = arith.constant 0 : index
    %13 = vector.load %arg5[%c0_10, %c0_11, %c0_12] : memref<1x1x128xf32, #tpu.memory_space<vmem>>, vector<1x1x128xf32>
    %14 = vector.shape_cast %13 : vector<1x1x128xf32> to vector<1x128xf32>
    %15 = vector.broadcast %14 : vector<1x128xf32> to vector<16x128xf32>
    %16 = arith.addf %12, %15 : vector<16x128xf32>
    %cst_13 = arith.constant 0.000000e+00 : f32
    %17 = vector.broadcast %cst_13 : f32 to vector<16x128xf32>
    %18 = arith.maximumf %16, %17 : vector<16x128xf32>
    %c0_14 = arith.constant 0 : index
    %c0_15 = arith.constant 0 : index
    %19 = vector.load %arg6[%c0_14, %c0_15] : memref<8x128xbf16, #tpu.memory_space<vmem>>, vector<8x128xbf16>
    %20 = arith.truncf %18 : vector<16x128xf32> to vector<16x128xbf16>
    %cst_16 = arith.constant dense<0.000000e+00> : vector<8x16xf32>
    %21 = tpu.matmul %19, %20, %cst_16 {dimension_numbers = #tpu.dot_dimension_numbers<[1], [1], [0], [0], [0, 0, 1, 0], [], []>} : vector<8x128xbf16>, vector<16x128xbf16>, vector<8x16xf32> -> vector<8x16xf32>
    %22 = vector.extract_strided_slice %21 {offsets = [0, 0], sizes = [1, 16], strides = [1, 1]} : vector<8x16xf32> to vector<1x16xf32>
    %c0_17 = arith.constant 0 : index
    %c0_18 = arith.constant 0 : index
    %23 = vector.load %arg7[%c0_17, %c0_18] : memref<1x1xf32, #tpu.memory_space<vmem>>, vector<1x1xf32>
    %24 = vector.broadcast %23 : vector<1x1xf32> to vector<1x16xf32>
    %25 = arith.addf %22, %24 : vector<1x16xf32>
    %26 = vector.shape_cast %25 : vector<1x16xf32> to vector<1x1x16xf32>
    %c0_19 = arith.constant 0 : index
    %c0_20 = arith.constant 0 : index
    %c0_21 = arith.constant 0 : index
    %27 = vector.load %arg8[%c0_19, %c0_20, %c0_21] : memref<1x1x16xf32, #tpu.memory_space<vmem>>, vector<1x1x16xf32>
    tpu.vector_store %arg8[%c0_19, %c0_20, %c0_21], %26 {strides = array<i32>} : memref<1x1x16xf32, #tpu.memory_space<vmem>>, vector<1x1x16xf32>,
    return
  }
  func.func @transform_0(%arg0: i32) -> (i32, i32) {
    %c0_i32 = arith.constant 0 : i32
    %c0_i32_0 = arith.constant 0 : i32
    return %arg0, %c0_i32 : i32, i32
  }
  func.func @transform_1(%arg0: i32) -> (i32, i32) {
    %c0_i32 = arith.constant 0 : i32
    %c0_i32_0 = arith.constant 0 : i32
    %c0_i32_1 = arith.constant 0 : i32
    return %c0_i32, %c0_i32_0 : i32, i32
  }
  func.func @transform_2(%arg0: i32) -> (i32, i32) {
    %c0_i32 = arith.constant 0 : i32
    %c0_i32_0 = arith.constant 0 : i32
    %c0_i32_1 = arith.constant 0 : i32
    return %c0_i32, %c0_i32_0 : i32, i32
  }
  func.func @transform_3(%arg0: i32) -> (i32, i32, i32) {
    %c0_i32 = arith.constant 0 : i32
    %c0_i32_0 = arith.constant 0 : i32
    %c0_i32_1 = arith.constant 0 : i32
    %c0_i32_2 = arith.constant 0 : i32
    return %c0_i32, %c0_i32_0, %c0_i32_1 : i32, i32, i32
  }
  func.func @transform_4(%arg0: i32) -> (i32, i32, i32) {
    %c0_i32 = arith.constant 0 : i32
    %c0_i32_0 = arith.constant 0 : i32
    %c0_i32_1 = arith.constant 0 : i32
    %c0_i32_2 = arith.constant 0 : i32
    return %c0_i32, %c0_i32_0, %c0_i32_1 : i32, i32, i32
  }
  func.func @transform_5(%arg0: i32) -> (i32, i32) {
    %c0_i32 = arith.constant 0 : i32
    %c0_i32_0 = arith.constant 0 : i32
    %c0_i32_1 = arith.constant 0 : i32
    return %c0_i32, %c0_i32_0 : i32, i32
  }
  func.func @transform_6(%arg0: i32) -> (i32, i32) {
    %c0_i32 = arith.constant 0 : i32
    %c0_i32_0 = arith.constant 0 : i32
    %c0_i32_1 = arith.constant 0 : i32
    return %c0_i32, %c0_i32_0 : i32, i32
  }
  func.func @transform_7(%arg0: i32) -> (i32, i32, i32) {
    %c0_i32 = arith.constant 0 : i32
    %c0_i32_0 = arith.constant 0 : i32
    %c0_i32_1 = arith.constant 0 : i32
    return %arg0, %c0_i32, %c0_i32_0 : i32, i32, i32
  }
}

</mosaic_0001>

<llo_original>
// kernel: tpu_custom_call.1
$region0: #{tpu_custom_call.1}
  #allocation0 [shape = 'u32[]', space=smem, size = 0x4, offset = 0x4, fixed_abs, tag = 'smem constant byte address 0x4 - core index']
  #allocation1 [shape = 'u32[72,128]{1,0:T(1,128)}', space=vmem, size = 0x9000, scoped, tag = 'internal scratch']
  #allocation2 [shape = 'f32[1,1]{1,0:T(1,128)S(1)}', space=vmem, size = 0x200, scoped, tag = 'scoped memory for tpu_custom_call.1']
  %s0 = inlined_call_operand.hbm [shape: f32[32,128], index: 0, kind: input, shape index: {}]
  %s1 = inlined_call_operand.hbm [shape: bf16[128,128], index: 1, kind: input, shape index: {}]
  %s2 = inlined_call_operand.vmem [shape: f32[1,128], index: 2, kind: input, shape index: {}]
  %s3 = inlined_call_operand.hbm [shape: bf16[1,128,128], index: 3, kind: input, shape index: {}]
  %s4 = inlined_call_operand.vmem [shape: f32[1,1,128], index: 4, kind: input, shape index: {}]
  %s5 = inlined_call_operand.vmem [shape: bf16[8,128], index: 5, kind: input, shape index: {}]
  %s6 = inlined_call_operand.<no memory space> [shape: f32[1,1], index: 6, kind: input, shape index: {}]
  %s7 = inlined_call_operand.hbm [shape: f32[2,1,16], index: 7, kind: output, shape index: {}]
  %s8 = sld [smem:[#allocation0]]
  $region73: #{tpu_custom_call.1} parent=0
    _
  %s10 = ssub.s32 1, %s8
  %s11 = scalar_select 0, %s10, %s8
  %v12 = vstv %s6
  %13 = vst [vmem:[#allocation2] sm:$0x1] %v12
  $region1: #{tpu_custom_call.1} parent=0
    #allocation3 [shape = 'u8[16384]{0}', space=vmem, size = 0x4000, scoped, tag = 'input window, operand 0']
    #allocation4 [shape = 's32[2]{0}', space=sflag, size = 0x8, scoped, tag = 'scoped memory for tpu_custom_call.1']
    #allocation5 [shape = 's32[2]{0}', space=sflag, size = 0x8, scoped, tag = 'scoped memory for tpu_custom_call.1']
    #allocation6 [shape = 'u8[32768]{0}', space=vmem, size = 0x8000, scoped, tag = 'input window, operand 1, single buffered']
    #allocation7 [shape = 's32[1]{0}', space=sflag, size = 0x4, scoped, tag = 'scoped memory for tpu_custom_call.1']
    #allocation8 [shape = 'u8[32768]{0}', space=vmem, size = 0x8000, scoped, tag = 'input window, operand 3, single buffered']
    #allocation9 [shape = 'u8[1024]{0}', space=vmem, size = 0x400, scoped, tag = 'output window, operand 0']
    %14 = vsyncpa [#allocation4], 0
    %s15 = scalar_lea.sflag [#allocation4], 1
    %16 = vsyncpa %s15, 0
    %17 = vsyncpa [#allocation7], 0
    %18 = vsyncpa [#allocation5], 0
    %s19 = scalar_lea.sflag [#allocation5], 1
    %20 = vsyncpa %s19, 0
    loop: start=0, step=1, limit=4
    $region2: #{tpu_custom_call.1} parent=1 // loop_pre_header
      _
    $region3: #{tpu_custom_call.1} parent=1 // loop_header
      %s22 = sphi 0, %s26
      %p23 = scmp.ge.s32.totalorder %s22, 4
      %s32 = sphi 0, %s34
      %s35 = sphi 0, %s32
      %s36 = sphi 0, %s35
      %s52 = sphi 0, %s36
      %s56 = sphi 0, %s56
      %s58 = sphi 0, %s56
      %s59 = sphi 0, %s58
      %s73 = sphi 0, %s59
      %s77 = sphi 0, %s77
      %s79 = sphi 0, %s77
      %s80 = sphi 0, %s79
      %s94 = sphi 0, %s80
      %s98 = sphi 0, %s98
      %s100 = sphi 0, %s98
      %s101 = sphi 0, %s100
      %s115 = sphi 0, %s101
      %s119 = sphi 0, %s119
      %s121 = sphi 0, %s119
      %s122 = sphi 0, %s121
      %s136 = sphi 0, %s122
      %s140 = sphi 0, %s140
      %s142 = sphi 0, %s140
      %s143 = sphi 0, %s142
      %s157 = sphi 0, %s143
      %s161 = sphi 0, %s161
      %s163 = sphi 0, %s161
      %s164 = sphi 0, %s163
      %s178 = sphi 0, %s164
      %s184 = sphi 0, %s186
      %s187 = sphi 0, %s184
      %s188 = sphi 0, %s187
      %s204 = sphi 0, %s188
    $region4: #{tpu_custom_call.1} parent=1 // loop_header_branch
      %25 = sbr.rel (%p23) target = $region8
    $region5: #{tpu_custom_call.1} parent=1 // loop_body
      %s27 = ssub.s32 %s22, 1
      %s28 = ssub.s32 %s22, 2
      %s29 = sadd.s32 %s22, 1
      %s30 = ssub.s32 %s22, %s29
      %p31 = scmp.eq.s32.totalorder %s30, 0
      %s33 = sadd.s32 %s32, 1
      %s34 = scalar_select %p31, %s32, %s33
      %p37 = pneg %p31
      %p38 = scmp.eq.s32.totalorder %s22, 1
      %p39 = por %p37, %p38
      %p40 = scmp.ne.s32.totalorder %s32, %s35
      %p41 = scmp.eq.s32.totalorder %s22, 0
      %p42 = por %p40, %p41
      %p43 = scmp.ne.s32.totalorder %s32, %s35
      %p44 = scmp.eq.s32.totalorder %s27, 1
      %p45 = por %p43, %p44
      %p46 = scmp.ne.s32.totalorder %s35, %s36
      %p47 = scmp.eq.s32.totalorder %s27, 0
      %p48 = por %p46, %p47
      %p49 = scmp.ne.s32.totalorder %s35, %s36
      %p50 = scmp.eq.s32.totalorder %s28, 1
      %p51 = por %p49, %p50
      %p53 = scmp.ne.s32.totalorder %s36, %s52
      %p54 = scmp.eq.s32.totalorder %s28, 0
      %p55 = por %p53, %p54
      %s57 = sadd.s32 %s56, 1
      %p60 = scmp.eq.s32.totalorder %s22, 1
      %p61 = scmp.ne.s32.totalorder %s56, %s58
      %p62 = scmp.eq.s32.totalorder %s22, 0
      %p63 = por %p61, %p62
      %p64 = scmp.ne.s32.totalorder %s56, %s58
      %p65 = scmp.eq.s32.totalorder %s27, 1
      %p66 = por %p64, %p65
      %p67 = scmp.ne.s32.totalorder %s58, %s59
      %p68 = scmp.eq.s32.totalorder %s27, 0
      %p69 = por %p67, %p68
      %p70 = scmp.ne.s32.totalorder %s58, %s59
      %p71 = scmp.eq.s32.totalorder %s28, 1
      %p72 = por %p70, %p71
      %p74 = scmp.ne.s32.totalorder %s59, %s73
      %p75 = scmp.eq.s32.totalorder %s28, 0
      %p76 = por %p74, %p75
      %s78 = sadd.s32 %s77, 1
      %p81 = scmp.eq.s32.totalorder %s22, 1
      %p82 = scmp.ne.s32.totalorder %s77, %s79
      %p83 = scmp.eq.s32.totalorder %s22, 0
      %p84 = por %p82, %p83
      %p85 = scmp.ne.s32.totalorder %s77, %s79
      %p86 = scmp.eq.s32.totalorder %s27, 1
      %p87 = por %p85, %p86
      %p88 = scmp.ne.s32.totalorder %s79, %s80
      %p89 = scmp.eq.s32.totalorder %s27, 0
      %p90 = por %p88, %p89
      %p91 = scmp.ne.s32.totalorder %s79, %s80
      %p92 = scmp.eq.s32.totalorder %s28, 1
      %p93 = por %p91, %p92
      %p95 = scmp.ne.s32.totalorder %s80, %s94
      %p96 = scmp.eq.s32.totalorder %s28, 0
      %p97 = por %p95, %p96
      %s99 = sadd.s32 %s98, 1
      %p102 = scmp.eq.s32.totalorder %s22, 1
      %p103 = scmp.ne.s32.totalorder %s98, %s100
      %p104 = scmp.eq.s32.totalorder %s22, 0
      %p105 = por %p103, %p104
      %p106 = scmp.ne.s32.totalorder %s98, %s100
      %p107 = scmp.eq.s32.totalorder %s27, 1
      %p108 = por %p106, %p107
      %p109 = scmp.ne.s32.totalorder %s100, %s101
      %p110 = scmp.eq.s32.totalorder %s27, 0
      %p111 = por %p109, %p110
      %p112 = scmp.ne.s32.totalorder %s100, %s101
      %p113 = scmp.eq.s32.totalorder %s28, 1
      %p114 = por %p112, %p113
      %p116 = scmp.ne.s32.totalorder %s101, %s115
      %p117 = scmp.eq.s32.totalorder %s28, 0
      %p118 = por %p116, %p117
      %s120 = sadd.s32 %s119, 1
      %p123 = scmp.eq.s32.totalorder %s22, 1
      %p124 = scmp.ne.s32.totalorder %s119, %s121
      %p125 = scmp.eq.s32.totalorder %s22, 0
      %p126 = por %p124, %p125
      %p127 = scmp.ne.s32.totalorder %s119, %s121
      %p128 = scmp.eq.s32.totalorder %s27, 1
      %p129 = por %p127, %p128
      %p130 = scmp.ne.s32.totalorder %s121, %s122
      %p131 = scmp.eq.s32.totalorder %s27, 0
      %p132 = por %p130, %p131
      %p133 = scmp.ne.s32.totalorder %s121, %s122
      %p134 = scmp.eq.s32.totalorder %s28, 1
      %p135 = por %p133, %p134
      %p137 = scmp.ne.s32.totalorder %s122, %s136
      %p138 = scmp.eq.s32.totalorder %s28, 0
      %p139 = por %p137, %p138
      %s141 = sadd.s32 %s140, 1
      %p144 = scmp.eq.s32.totalorder %s22, 1
      %p145 = scmp.ne.s32.totalorder %s140, %s142
      %p146 = scmp.eq.s32.totalorder %s22, 0
      %p147 = por %p145, %p146
      %p148 = scmp.ne.s32.totalorder %s140, %s142
      %p149 = scmp.eq.s32.totalorder %s27, 1
      %p150 = por %p148, %p149
      %p151 = scmp.ne.s32.totalorder %s142, %s143
      %p152 = scmp.eq.s32.totalorder %s27, 0
      %p153 = por %p151, %p152
      %p154 = scmp.ne.s32.totalorder %s142, %s143
      %p155 = scmp.eq.s32.totalorder %s28, 1
      %p156 = por %p154, %p155
      %p158 = scmp.ne.s32.totalorder %s143, %s157
      %p159 = scmp.eq.s32.totalorder %s28, 0
      %p160 = por %p158, %p159
      %s162 = sadd.s32 %s161, 1
      %p165 = scmp.eq.s32.totalorder %s22, 1
      %p166 = scmp.ne.s32.totalorder %s161, %s163
      %p167 = scmp.eq.s32.totalorder %s22, 0
      %p168 = por %p166, %p167
      %p169 = scmp.ne.s32.totalorder %s161, %s163
      %p170 = scmp.eq.s32.totalorder %s27, 1
      %p171 = por %p169, %p170
      %p172 = scmp.ne.s32.totalorder %s163, %s164
      %p173 = scmp.eq.s32.totalorder %s27, 0
      %p174 = por %p172, %p173
      %p175 = scmp.ne.s32.totalorder %s163, %s164
      %p176 = scmp.eq.s32.totalorder %s28, 1
      %p177 = por %p175, %p176
      %p179 = scmp.ne.s32.totalorder %s164, %s178
      %p180 = scmp.eq.s32.totalorder %s28, 0
      %p181 = por %p179, %p180
      %s182 = ssub.s32 %s22, %s29
      %p183 = scmp.eq.s32.totalorder %s182, 0
      %s185 = sadd.s32 %s184, 1
      %s186 = scalar_select %p183, %s184, %s185
      %p189 = pneg %p183
      %p190 = scmp.eq.s32.totalorder %s22, 1
      %p191 = por %p189, %p190
      %p192 = scmp.ne.s32.totalorder %s184, %s187
      %p193 = scmp.eq.s32.totalorder %s22, 0
      %p194 = por %p192, %p193
      %p195 = scmp.ne.s32.totalorder %s184, %s187
      %p196 = scmp.eq.s32.totalorder %s27, 1
      %p197 = por %p195, %p196
      %p198 = scmp.ne.s32.totalorder %s187, %s188
      %p199 = scmp.eq.s32.totalorder %s27, 0
      %p200 = por %p198, %p199
      %p201 = scmp.ne.s32.totalorder %s187, %s188
      %p202 = scmp.eq.s32.totalorder %s28, 1
      %p203 = por %p201, %p202
      %p205 = scmp.ne.s32.totalorder %s188, %s204
      %p206 = scmp.eq.s32.totalorder %s28, 0
      %p207 = por %p205, %p206
      %p208 = scmp.le.s32.totalorder 1, %s22
      %p209 = scmp.lt.s32.totalorder %s22, 3
      %p210 = pnand %p208, %p209
      %p211 = pneg %p210
      // Predicated region
      $region9: #{tpu_custom_call.1} parent=5 // pred_check
        _
      $region10: #{tpu_custom_call.1} parent=5 // pred_check_branch
        %213 = sbr.rel (%p210) target = $region12
      $region11: #{tpu_custom_call.1} parent=5 // pred_region
        %s214 = ssub.s32 %s22, 1
        // Predicated region
        $region13: #{tpu_custom_call.1} parent=11 // pred_check
          %p215 = pneg %p69
        $region14: #{tpu_custom_call.1} parent=11 // pred_check_branch
          %217 = sbr.rel (%p215) target = $region16
        $region15: #{tpu_custom_call.1} parent=11 // pred_region
          %219 = vsyncadd [#allocation7], 0
          %s220 = sshll.u32 %s1, 4
          %s221 = int_to_ptr.hbm [resolvable:$true] %s220
          %s222 = sshll.u32 [#allocation6], 4
          %s223 = int_to_ptr.vmem [resolvable:$true] %s222
          %228 = dma.hbm_to_vmem [thread:$0]  %s221, 1024, %s223, [#allocation7], 64, 64, 4
        $region16: #{tpu_custom_call.1} parent=11 // pred_fallthru
          _
        // Predicated region
        $region17: #{tpu_custom_call.1} parent=11 // pred_check
          %p229 = pneg %p90
        $region18: #{tpu_custom_call.1} parent=11 // pred_check_branch
          %231 = sbr.rel (%p229) target = $region20
        $region19: #{tpu_custom_call.1} parent=11 // pred_region
          _
        $region20: #{tpu_custom_call.1} parent=11 // pred_fallthru
          _
        // Predicated region
        $region21: #{tpu_custom_call.1} parent=11 // pred_check
          %p232 = pneg %p111
        $region22: #{tpu_custom_call.1} parent=11 // pred_check_branch
          %234 = sbr.rel (%p232) target = $region24
        $region23: #{tpu_custom_call.1} parent=11 // pred_region
          %236 = vsyncadd [#allocation7], 0
          %s237 = sshll.u32 %s3, 4
          %s238 = int_to_ptr.hbm [resolvable:$true] %s237
          %s239 = sshll.u32 [#allocation8], 4
          %s240 = int_to_ptr.vmem [resolvable:$true] %s239
          %245 = dma.hbm_to_vmem [thread:$0]  %s238, 1024, %s240, [#allocation7], 64, 64, 4
        $region24: #{tpu_custom_call.1} parent=11 // pred_fallthru
          _
        // Predicated region
        $region25: #{tpu_custom_call.1} parent=11 // pred_check
          %p246 = pneg %p132
        $region26: #{tpu_custom_call.1} parent=11 // pred_check_branch
          %248 = sbr.rel (%p246) target = $region28
        $region27: #{tpu_custom_call.1} parent=11 // pred_region
          _
        $region28: #{tpu_custom_call.1} parent=11 // pred_fallthru
          _
        // Predicated region
        $region29: #{tpu_custom_call.1} parent=11 // pred_check
          %p249 = pneg %p153
        $region30: #{tpu_custom_call.1} parent=11 // pred_check_branch
          %251 = sbr.rel (%p249) target = $region32
        $region31: #{tpu_custom_call.1} parent=11 // pred_region
          _
        $region32: #{tpu_custom_call.1} parent=11 // pred_fallthru
          _
        // Predicated region
        $region33: #{tpu_custom_call.1} parent=11 // pred_check
          %p252 = pneg %p174
        $region34: #{tpu_custom_call.1} parent=11 // pred_check_branch
          %254 = sbr.rel (%p252) target = $region36
        $region35: #{tpu_custom_call.1} parent=11 // pred_region
          _
        $region36: #{tpu_custom_call.1} parent=11 // pred_fallthru
          _
      $region12: #{tpu_custom_call.1} parent=5 // pred_fallthru
        _
      %p255 = scmp.lt.s32.totalorder %s22, 2
      // Predicated region
      $region37: #{tpu_custom_call.1} parent=5 // pred_check
        %p256 = pneg %p255
      $region38: #{tpu_custom_call.1} parent=5 // pred_check_branch
        %258 = sbr.rel (%p256) target = $region40
      $region39: #{tpu_custom_call.1} parent=5 // pred_region
        // Predicated region
        $region41: #{tpu_custom_call.1} parent=39 // pred_check
          %p259 = pneg %p42
        $region42: #{tpu_custom_call.1} parent=39 // pred_check_branch
          %261 = sbr.rel (%p259) target = $region44
        $region43: #{tpu_custom_call.1} parent=39 // pred_region
          %s262 = sand.u32 %s32, 1
          %s263 = scalar_lea.sflag [#allocation4], %s262
          %s264 = sand.u32 %s32, 1
          %s265 = smul.addr %s264, 16
          %s266 = scalar_lea.vmem [#allocation3], %s265
          %s267 = smul.u32 2, %s22
          %269 = vsyncadd %s263, 0
          %s270 = smul.addr %s267, 8
          %s271 = scalar_lea.hbm %s0, %s270
          %s272 = sshll.u32 %s271, 4
          %s273 = int_to_ptr.hbm [resolvable:$true] %s272
          %s274 = sshll.u32 %s266, 4
          %s275 = int_to_ptr.vmem [resolvable:$true] %s274
          %280 = dma.hbm_to_vmem [thread:$0]  %s273, 256, %s275, %s263, 128, 128, 8
        $region44: #{tpu_custom_call.1} parent=39 // pred_fallthru
          _
      $region40: #{tpu_custom_call.1} parent=5 // pred_fallthru
        _
      %p281 = scmp.le.s32.totalorder 1, %s22
      %p282 = scmp.lt.s32.totalorder %s22, 3
      %p283 = pnand %p281, %p282
      %p284 = pneg %p283
      // Predicated region
      $region45: #{tpu_custom_call.1} parent=5 // pred_check
        _
      $region46: #{tpu_custom_call.1} parent=5 // pred_check_branch
        %286 = sbr.rel (%p283) target = $region48
      $region47: #{tpu_custom_call.1} parent=5 // pred_region
        %s287 = ssub.s32 %s22, 1
        %s288 = sand.u32 %s35, 1
        %s289 = scalar_lea.sflag [#allocation4], %s288
        %s290 = sand.u32 %s35, 1
        %s291 = smul.addr %s290, 16
        %s292 = scalar_lea.vmem [#allocation3], %s291
        // Predicated region
        $region49: #{tpu_custom_call.1} parent=47 // pred_check
          %p293 = pneg %p48
        $region50: #{tpu_custom_call.1} parent=47 // pred_check_branch
          %295 = sbr.rel (%p293) target = $region52
        $region51: #{tpu_custom_call.1} parent=47 // pred_region
          %297 = dma.done %s289, 256
        $region52: #{tpu_custom_call.1} parent=47 // pred_fallthru
          _
        // Predicated region
        $region53: #{tpu_custom_call.1} parent=47 // pred_check
          %p298 = pneg %p69
        $region54: #{tpu_custom_call.1} parent=47 // pred_check_branch
          %300 = sbr.rel (%p298) target = $region56
        $region55: #{tpu_custom_call.1} parent=47 // pred_region
          %302 = dma.done [#allocation7], 1024
        $region56: #{tpu_custom_call.1} parent=47 // pred_fallthru
          _
        // Predicated region
        $region57: #{tpu_custom_call.1} parent=47 // pred_check
          %p303 = pneg %p111
        $region58: #{tpu_custom_call.1} parent=47 // pred_check_branch
          %305 = sbr.rel (%p303) target = $region60
        $region59: #{tpu_custom_call.1} parent=47 // pred_region
          %307 = dma.done [#allocation7], 1024
        $region60: #{tpu_custom_call.1} parent=47 // pred_fallthru
          _
        %s308 = sand.u32 %s35, 1
        %s309 = scalar_lea.sflag [#allocation4], %s308
        %s310 = sand.u32 %s35, 1
        %s311 = smul.addr %s310, 16
        %s312 = scalar_lea.vmem [#allocation3], %s311
        %p313 = pneg %p48
        %p314 = pneg %p45
        %p315 = pneg %p69
        %p316 = pneg %p66
        %p317 = pneg %p90
        %p318 = pneg %p87
        %p319 = pneg %p111
        %p320 = pneg %p108
        %p321 = pneg %p132
        %p322 = pneg %p129
        %p323 = pneg %p153
        %p324 = pneg %p150
        %p325 = pneg %p174
        %p326 = pneg %p171
        %p327 = pneg %p200
        %p328 = pneg %p197
        %s329 = sand.u32 %s187, 1
        %s330 = scalar_lea.sflag [#allocation5], %s329
        %s331 = sand.u32 %s187, 1
        %s332 = scalar_lea.vmem [#allocation9], %s331
        %s333 = smul.u32 2, %s27
        %v335 = vld [vmem:[%s292] sm:$0xff]
        %v336 = vld [vmem:[%s292 + $0x8] sm:$0xff]
        %v337 = vpack.c.bf16 %v336, %v335
        %v338 = vld [vmem:[#allocation6] sm:$0xf]
        %v339 = vld [vmem:[#allocation6 + $0x4] sm:$0xf]
        %v340 = vld [vmem:[#allocation6 + $0x8] sm:$0xf]
        %v341 = vld [vmem:[#allocation6 + $0xc] sm:$0xf]
        %v342 = vld [vmem:[#allocation6 + $0x10] sm:$0xf]
        %v343 = vld [vmem:[#allocation6 + $0x14] sm:$0xf]
        %v344 = vld [vmem:[#allocation6 + $0x18] sm:$0xf]
        %v345 = vld [vmem:[#allocation6 + $0x1c] sm:$0xf]
        %v346 = vld [vmem:[#allocation6 + $0x20] sm:$0xf]
        %v347 = vld [vmem:[#allocation6 + $0x24] sm:$0xf]
        %v348 = vld [vmem:[#allocation6 + $0x28] sm:$0xf]
        %v349 = vld [vmem:[#allocation6 + $0x2c] sm:$0xf]
        %v350 = vld [vmem:[#allocation6 + $0x30] sm:$0xf]
        %v351 = vld [vmem:[#allocation6 + $0x34] sm:$0xf]
        %v352 = vld [vmem:[#allocation6 + $0x38] sm:$0xf]
        %v353 = vld [vmem:[#allocation6 + $0x3c] sm:$0xf]
        %v354 = vld [vmem:[%s2] sm:$0x1]
        %v356 = vperm.slane %v354, 0
        %v374 = vunpack.c.l.b16 %v338
        %v375 = vunpack.c.l.b16 %v339
        %v376 = vunpack.c.l.b16 %v340
        %v377 = vunpack.c.l.b16 %v341
        %v378 = vunpack.c.l.b16 %v342
        %v379 = vunpack.c.l.b16 %v343
        %v380 = vunpack.c.l.b16 %v344
        %v381 = vunpack.c.l.b16 %v345
        %v382 = vunpack.c.l.b16 %v346
        %v383 = vunpack.c.l.b16 %v347
        %v384 = vunpack.c.l.b16 %v348
        %v385 = vunpack.c.l.b16 %v349
        %v386 = vunpack.c.l.b16 %v350
        %v387 = vunpack.c.l.b16 %v351
        %v388 = vunpack.c.l.b16 %v352
        %v389 = vunpack.c.l.b16 %v353
        %v390 = vpack.c.b16 %v375, %v374
        %v391 = vpack.c.b16 %v377, %v376
        %v392 = vpack.c.b16 %v379, %v378
        %v393 = vpack.c.b16 %v381, %v380
        %v394 = vpack.c.b16 %v383, %v382
        %v395 = vpack.c.b16 %v385, %v384
        %v396 = vpack.c.b16 %v387, %v386
        %v397 = vpack.c.b16 %v389, %v388
        %406 = vmatpush.bf16.msra.mxu0 %v397
        %407 = vmatpush.bf16.msra.mxu0 %v396
        %408 = vmatpush.bf16.msra.mxu0 %v395
        %409 = vmatpush.bf16.msra.mxu0 %v394
        %410 = vmatpush.bf16.msra.mxu0 %v393
        %411 = vmatpush.bf16.msra.mxu0 %v392
        %412 = vmatpush.bf16.msra.mxu0 %v391
        %413 = vmatpush.bf16.msra.mxu0 %v390
        %414 = vmatmul.bf16.gmra.mxu0 %v337
        %v415 = vpop.f32.mrf.mxu0
        %v416 = vadd.f32 %v356, %v415
        %v417 = vpop.f32.mrf.mxu0
        %v418 = vadd.f32 %v356, %v417
        %419 = vdwg.mxu0
        %v420 = vmax.f32 %v416, 0.0
        %v421 = vmax.f32 %v418, 0.0
        %v422 = vpack.c.bf16 %v421, %v420
        %v423 = vld [vmem:[#allocation8] sm:$0xf]
        %v424 = vld [vmem:[#allocation8 + $0x4] sm:$0xf]
        %v425 = vld [vmem:[#allocation8 + $0x8] sm:$0xf]
        %v426 = vld [vmem:[#allocation8 + $0xc] sm:$0xf]
        %v427 = vld [vmem:[#allocation8 + $0x10] sm:$0xf]
        %v428 = vld [vmem:[#allocation8 + $0x14] sm:$0xf]
        %v429 = vld [vmem:[#allocation8 + $0x18] sm:$0xf]
        %v430 = vld [vmem:[#allocation8 + $0x1c] sm:$0xf]
        %v431 = vld [vmem:[#allocation8 + $0x20] sm:$0xf]
        %v432 = vld [vmem:[#allocation8 + $0x24] sm:$0xf]
        %v433 = vld [vmem:[#allocation8 + $0x28] sm:$0xf]
        %v434 = vld [vmem:[#allocation8 + $0x2c] sm:$0xf]
        %v435 = vld [vmem:[#allocation8 + $0x30] sm:$0xf]
        %v436 = vld [vmem:[#allocation8 + $0x34] sm:$0xf]
        %v437 = vld [vmem:[#allocation8 + $0x38] sm:$0xf]
        %v438 = vld [vmem:[#allocation8 + $0x3c] sm:$0xf]
        %v439 = vld [vmem:[%s4] sm:$0x1]
        %v441 = vperm.slane %v439, 0
        %v459 = vunpack.c.l.b16 %v423
        %v460 = vunpack.c.l.b16 %v424
        %v461 = vunpack.c.l.b16 %v425
        %v462 = vunpack.c.l.b16 %v426
        %v463 = vunpack.c.l.b16 %v427
        %v464 = vunpack.c.l.b16 %v428
        %v465 = vunpack.c.l.b16 %v429
        %v466 = vunpack.c.l.b16 %v430
        %v467 = vunpack.c.l.b16 %v431
        %v468 = vunpack.c.l.b16 %v432
        %v469 = vunpack.c.l.b16 %v433
        %v470 = vunpack.c.l.b16 %v434
        %v471 = vunpack.c.l.b16 %v435
        %v472 = vunpack.c.l.b16 %v436
        %v473 = vunpack.c.l.b16 %v437
        %v474 = vunpack.c.l.b16 %v438
        %v475 = vpack.c.b16 %v460, %v459
        %v476 = vpack.c.b16 %v462, %v461
        %v477 = vpack.c.b16 %v464, %v463
        %v478 = vpack.c.b16 %v466, %v465
        %v479 = vpack.c.b16 %v468, %v467
        %v480 = vpack.c.b16 %v470, %v469
        %v481 = vpack.c.b16 %v472, %v471
        %v482 = vpack.c.b16 %v474, %v473
        %491 = vmatpush.bf16.msra.mxu0 %v482
        %492 = vmatpush.bf16.msra.mxu0 %v481
        %493 = vmatpush.bf16.msra.mxu0 %v480
        %494 = vmatpush.bf16.msra.mxu0 %v479
        %495 = vmatpush.bf16.msra.mxu0 %v478
        %496 = vmatpush.bf16.msra.mxu0 %v477
        %497 = vmatpush.bf16.msra.mxu0 %v476
        %498 = vmatpush.bf16.msra.mxu0 %v475
        %499 = vmatmul.bf16.gmra.mxu0 %v422
        %v500 = vpop.f32.mrf.mxu0
        %v501 = vadd.f32 %v441, %v500
        %v502 = vpop.f32.mrf.mxu0
        %v503 = vadd.f32 %v441, %v502
        %504 = vdwg.mxu0
        %v505 = vmax.f32 %v501, 0.0
        %v506 = vmax.f32 %v503, 0.0
        %v507 = vld [vmem:[%s5] sm:$0xf]
        %v508 = vpack.c.bf16 %v506, %v505
        %509 = vmatpush.bf16.xpose.msra.mxu0 0
        %510 = vmatpush.bf16.xpose.msra.mxu0 0
        %511 = vmatpush.bf16.xpose.msra.mxu0 0
        %512 = vmatpush.bf16.xpose.msra.mxu0 0
        %513 = vmatpush.bf16.xpose.msra.mxu0 0
        %514 = vmatpush.bf16.xpose.msra.mxu0 0
        %515 = vmatpush.bf16.xpose.msra.mxu0 0
        %516 = vmatpush.bf16.xpose.msra.mxu0 %v508
        %517 = vmatmul.bf16.gmra.mxu0 %v507
        %v518 = vpop.f32.mrf.mxu0
        %v519 = vadd.f32 0.0, %v518
        %v520 = vpop.f32.mrf.mxu0
        %521 = vdwg.mxu0
        %v522 = vld [vmem:[#allocation2] sm:$0x1]
        %524 = vset.pattern.permute.xlu0 0
        %525 = vperm.xlu0 %524, %v522
        %v526 = vpop.permute.xlu0 %525
        %v528 = vperm.slane %v526, 0
        %v529 = vadd.f32 %v519, %v528
        %vm530 = vcmask 122880
        %531 = vst.msk [vmem:[%s332] sm:$0x1] %vm530, %v529
        %s532 = sand.u32 %s187, 1
        %s533 = scalar_lea.sflag [#allocation5], %s532
        %s534 = sand.u32 %s187, 1
        %s535 = scalar_lea.vmem [#allocation9], %s534
        // Predicated region
        $region61: #{tpu_custom_call.1} parent=47 // pred_check
          %p536 = pneg %p197
        $region62: #{tpu_custom_call.1} parent=47 // pred_check_branch
          %538 = sbr.rel (%p536) target = $region64
        $region63: #{tpu_custom_call.1} parent=47 // pred_region
          %540 = vsyncadd %s533, 0
          %s541 = scalar_lea.hbm %s7, %s27
          %s543 = sshll.u32 %s535, 4
          %s544 = int_to_ptr.vmem [resolvable:$true] %s543
          %s545 = sshll.u32 %s541, 4
          %s546 = int_to_ptr.hbm [resolvable:$true] %s545
          %548 = dma.vmem_to_hbm [thread:$0]  %s544, 16, %s546, %s533
        $region64: #{tpu_custom_call.1} parent=47 // pred_fallthru
          _
      $region48: #{tpu_custom_call.1} parent=5 // pred_fallthru
        _
      %p549 = scmp.le.s32.totalorder 2, %s22
      // Predicated region
      $region65: #{tpu_custom_call.1} parent=5 // pred_check
        %p550 = pneg %p549
      $region66: #{tpu_custom_call.1} parent=5 // pred_check_branch
        %552 = sbr.rel (%p550) target = $region68
      $region67: #{tpu_custom_call.1} parent=5 // pred_region
        %s553 = ssub.s32 %s22, 2
        // Predicated region
        $region69: #{tpu_custom_call.1} parent=67 // pred_check
          %p554 = pneg %p203
        $region70: #{tpu_custom_call.1} parent=67 // pred_check_branch
          %556 = sbr.rel (%p554) target = $region72
        $region71: #{tpu_custom_call.1} parent=67 // pred_region
          %s557 = sand.u32 %s188, 1
          %s558 = scalar_lea.sflag [#allocation5], %s557
          %s559 = sand.u32 %s188, 1
          %s560 = scalar_lea.vmem [#allocation9], %s559
          %562 = dma.done %s558, 16
        $region72: #{tpu_custom_call.1} parent=67 // pred_fallthru
          _
      $region68: #{tpu_custom_call.1} parent=5 // pred_fallthru
        _
    $region6: #{tpu_custom_call.1} parent=1 // loop_footer
      %s26 = sadd.s32 1, %s22
    $region7: #{tpu_custom_call.1} parent=1 // loop_footer_branch
      %21 = sbr.rel target = $region3
    $region8: #{tpu_custom_call.1} parent=1 // loop_exit
      _
    %563 = vsyncpa [#allocation4], 1
    %s564 = scalar_lea.sflag [#allocation4], 1
    %565 = vsyncpa %s564, 1
    %566 = vsyncpa [#allocation7], 1
    %567 = vsyncpa [#allocation5], 1
    %s568 = scalar_lea.sflag [#allocation5], 1
    %569 = vsyncpa %s568, 1

// kernel: tpu_custom_call.1
$region0: #{tpu_custom_call.1}
  #allocation0 [shape = 'u32[]', space=smem, size = 0x4, offset = 0x4, fixed_abs, tag = 'smem constant byte address 0x4 - core index']
  #allocation1 [shape = 'u32[72,128]{1,0:T(1,128)}', space=vmem, size = 0x9000, scoped, tag = 'internal scratch']
  #allocation2 [shape = 'f32[1,1]{1,0:T(1,128)S(1)}', space=vmem, size = 0x200, scoped, tag = 'scoped memory for tpu_custom_call.1']
  %s0 = inlined_call_operand.hbm [shape: f32[32,128], index: 0, kind: input, shape index: {}]
  %s1 = inlined_call_operand.hbm [shape: bf16[128,128], index: 1, kind: input, shape index: {}]
  %s2 = inlined_call_operand.vmem [shape: f32[1,128], index: 2, kind: input, shape index: {}]
  %s3 = inlined_call_operand.hbm [shape: bf16[1,128,128], index: 3, kind: input, shape index: {}]
  %s4 = inlined_call_operand.vmem [shape: f32[1,1,128], index: 4, kind: input, shape index: {}]
  %s5 = inlined_call_operand.vmem [shape: bf16[8,128], index: 5, kind: input, shape index: {}]
  %s6 = inlined_call_operand.<no memory space> [shape: f32[1,1], index: 6, kind: input, shape index: {}]
  %s7 = inlined_call_operand.hbm [shape: f32[2,1,16], index: 7, kind: output, shape index: {}]
  %s8 = sld [smem:[#allocation0]]
  $region73: #{tpu_custom_call.1} parent=0
    _
  %s10 = ssub.s32 1, %s8
  %s11 = scalar_select 0, %s10, %s8
  %v12 = vstv %s6
  %13 = vst [vmem:[#allocation2] sm:$0x1] %v12
  $region1: #{tpu_custom_call.1} parent=0
    #allocation3 [shape = 'u8[16384]{0}', space=vmem, size = 0x4000, scoped, tag = 'input window, operand 0']
    #allocation4 [shape = 's32[2]{0}', space=sflag, size = 0x8, scoped, tag = 'scoped memory for tpu_custom_call.1']
    #allocation5 [shape = 's32[2]{0}', space=sflag, size = 0x8, scoped, tag = 'scoped memory for tpu_custom_call.1']
    #allocation6 [shape = 'u8[32768]{0}', space=vmem, size = 0x8000, scoped, tag = 'input window, operand 1, single buffered']
    #allocation7 [shape = 's32[1]{0}', space=sflag, size = 0x4, scoped, tag = 'scoped memory for tpu_custom_call.1']
    #allocation8 [shape = 'u8[32768]{0}', space=vmem, size = 0x8000, scoped, tag = 'input window, operand 3, single buffered']
    #allocation9 [shape = 'u8[1024]{0}', space=vmem, size = 0x400, scoped, tag = 'output window, operand 0']
    %14 = vsyncpa [#allocation4], 0
    %s15 = scalar_lea.sflag [#allocation4], 1
    %16 = vsyncpa %s15, 0
    %17 = vsyncpa [#allocation7], 0
    %18 = vsyncpa [#allocation5], 0
    %s19 = scalar_lea.sflag [#allocation5], 1
    %20 = vsyncpa %s19, 0
    loop: start=0, step=1, limit=4
    $region2: #{tpu_custom_call.1} parent=1 // loop_pre_header
      _
    $region3: #{tpu_custom_call.1} parent=1 // loop_header
      %s22 = sphi 0, %s26
      %p23 = scmp.ge.s32.totalorder %s22, 4
      %s32 = sphi 0, %s34
      %s35 = sphi 0, %s32
      %s36 = sphi 0, %s35
      %s52 = sphi 0, %s36
      %s56 = sphi 0, %s56
      %s58 = sphi 0, %s56
      %s59 = sphi 0, %s58
      %s73 = sphi 0, %s59
      %s77 = sphi 0, %s77
      %s79 = sphi 0, %s77
      %s80 = sphi 0, %s79
      %s94 = sphi 0, %s80
      %s98 = sphi 0, %s98
      %s100 = sphi 0, %s98
      %s101 = sphi 0, %s100
      %s115 = sphi 0, %s101
      %s119 = sphi 0, %s119
      %s121 = sphi 0, %s119
      %s122 = sphi 0, %s121
      %s136 = sphi 0, %s122
      %s140 = sphi 0, %s140
      %s142 = sphi 0, %s140
      %s143 = sphi 0, %s142
      %s157 = sphi 0, %s143
      %s161 = sphi 0, %s161
      %s163 = sphi 0, %s161
      %s164 = sphi 0, %s163
      %s178 = sphi 0, %s164
      %s184 = sphi 0, %s186
      %s187 = sphi 0, %s184
      %s188 = sphi 0, %s187
      %s204 = sphi 0, %s188
    $region4: #{tpu_custom_call.1} parent=1 // loop_header_branch
      %25 = sbr.rel (%p23) target = $region8
    $region5: #{tpu_custom_call.1} parent=1 // loop_body
      %s27 = ssub.s32 %s22, 1
      %s28 = ssub.s32 %s22, 2
      %s29 = sadd.s32 %s22, 1
      %s30 = ssub.s32 %s22, %s29
      %p31 = scmp.eq.s32.totalorder %s30, 0
      %s33 = sadd.s32 %s32, 1
      %s34 = scalar_select %p31, %s32, %s33
      %p37 = pneg %p31
      %p38 = scmp.eq.s32.totalorder %s22, 1
      %p39 = por %p37, %p38
      %p40 = scmp.ne.s32.totalorder %s32, %s35
      %p41 = scmp.eq.s32.totalorder %s22, 0
      %p42 = por %p40, %p41
      %p43 = scmp.ne.s32.totalorder %s32, %s35
      %p44 = scmp.eq.s32.totalorder %s27, 1
      %p45 = por %p43, %p44
      %p46 = scmp.ne.s32.totalorder %s35, %s36
      %p47 = scmp.eq.s32.totalorder %s27, 0
      %p48 = por %p46, %p47
      %p49 = scmp.ne.s32.totalorder %s35, %s36
      %p50 = scmp.eq.s32.totalorder %s28, 1
      %p51 = por %p49, %p50
      %p53 = scmp.ne.s32.totalorder %s36, %s52
      %p54 = scmp.eq.s32.totalorder %s28, 0
      %p55 = por %p53, %p54
      %s57 = sadd.s32 %s56, 1
      %p60 = scmp.eq.s32.totalorder %s22, 1
      %p61 = scmp.ne.s32.totalorder %s56, %s58
      %p62 = scmp.eq.s32.totalorder %s22, 0
      %p63 = por %p61, %p62
      %p64 = scmp.ne.s32.totalorder %s56, %s58
      %p65 = scmp.eq.s32.totalorder %s27, 1
      %p66 = por %p64, %p65
      %p67 = scmp.ne.s32.totalorder %s58, %s59
      %p68 = scmp.eq.s32.totalorder %s27, 0
      %p69 = por %p67, %p68
      %p70 = scmp.ne.s32.totalorder %s58, %s59
      %p71 = scmp.eq.s32.totalorder %s28, 1
      %p72 = por %p70, %p71
      %p74 = scmp.ne.s32.totalorder %s59, %s73
      %p75 = scmp.eq.s32.totalorder %s28, 0
      %p76 = por %p74, %p75
      %s78 = sadd.s32 %s77, 1
      %p81 = scmp.eq.s32.totalorder %s22, 1
      %p82 = scmp.ne.s32.totalorder %s77, %s79
      %p83 = scmp.eq.s32.totalorder %s22, 0
      %p84 = por %p82, %p83
      %p85 = scmp.ne.s32.totalorder %s77, %s79
      %p86 = scmp.eq.s32.totalorder %s27, 1
      %p87 = por %p85, %p86
      %p88 = scmp.ne.s32.totalorder %s79, %s80
      %p89 = scmp.eq.s32.totalorder %s27, 0
      %p90 = por %p88, %p89
      %p91 = scmp.ne.s32.totalorder %s79, %s80
      %p92 = scmp.eq.s32.totalorder %s28, 1
      %p93 = por %p91, %p92
      %p95 = scmp.ne.s32.totalorder %s80, %s94
      %p96 = scmp.eq.s32.totalorder %s28, 0
      %p97 = por %p95, %p96
      %s99 = sadd.s32 %s98, 1
      %p102 = scmp.eq.s32.totalorder %s22, 1
      %p103 = scmp.ne.s32.totalorder %s98, %s100
      %p104 = scmp.eq.s32.totalorder %s22, 0
      %p105 = por %p103, %p104
      %p106 = scmp.ne.s32.totalorder %s98, %s100
      %p107 = scmp.eq.s32.totalorder %s27, 1
      %p108 = por %p106, %p107
      %p109 = scmp.ne.s32.totalorder %s100, %s101
      %p110 = scmp.eq.s32.totalorder %s27, 0
      %p111 = por %p109, %p110
      %p112 = scmp.ne.s32.totalorder %s100, %s101
      %p113 = scmp.eq.s32.totalorder %s28, 1
      %p114 = por %p112, %p113
      %p116 = scmp.ne.s32.totalorder %s101, %s115
      %p117 = scmp.eq.s32.totalorder %s28, 0
      %p118 = por %p116, %p117
      %s120 = sadd.s32 %s119, 1
      %p123 = scmp.eq.s32.totalorder %s22, 1
      %p124 = scmp.ne.s32.totalorder %s119, %s121
      %p125 = scmp.eq.s32.totalorder %s22, 0
      %p126 = por %p124, %p125
      %p127 = scmp.ne.s32.totalorder %s119, %s121
      %p128 = scmp.eq.s32.totalorder %s27, 1
      %p129 = por %p127, %p128
      %p130 = scmp.ne.s32.totalorder %s121, %s122
      %p131 = scmp.eq.s32.totalorder %s27, 0
      %p132 = por %p130, %p131
      %p133 = scmp.ne.s32.totalorder %s121, %s122
      %p134 = scmp.eq.s32.totalorder %s28, 1
      %p135 = por %p133, %p134
      %p137 = scmp.ne.s32.totalorder %s122, %s136
      %p138 = scmp.eq.s32.totalorder %s28, 0
      %p139 = por %p137, %p138
      %s141 = sadd.s32 %s140, 1
      %p144 = scmp.eq.s32.totalorder %s22, 1
      %p145 = scmp.ne.s32.totalorder %s140, %s142
      %p146 = scmp.eq.s32.totalorder %s22, 0
      %p147 = por %p145, %p146
      %p148 = scmp.ne.s32.totalorder %s140, %s142
      %p149 = scmp.eq.s32.totalorder %s27, 1
      %p150 = por %p148, %p149
      %p151 = scmp.ne.s32.totalorder %s142, %s143
      %p152 = scmp.eq.s32.totalorder %s27, 0
      %p153 = por %p151, %p152
      %p154 = scmp.ne.s32.totalorder %s142, %s143
      %p155 = scmp.eq.s32.totalorder %s28, 1
      %p156 = por %p154, %p155
      %p158 = scmp.ne.s32.totalorder %s143, %s157
      %p159 = scmp.eq.s32.totalorder %s28, 0
      %p160 = por %p158, %p159
      %s162 = sadd.s32 %s161, 1
      %p165 = scmp.eq.s32.totalorder %s22, 1
      %p166 = scmp.ne.s32.totalorder %s161, %s163
      %p167 = scmp.eq.s32.totalorder %s22, 0
      %p168 = por %p166, %p167
      %p169 = scmp.ne.s32.totalorder %s161, %s163
      %p170 = scmp.eq.s32.totalorder %s27, 1
      %p171 = por %p169, %p170
      %p172 = scmp.ne.s32.totalorder %s163, %s164
      %p173 = scmp.eq.s32.totalorder %s27, 0
      %p174 = por %p172, %p173
      %p175 = scmp.ne.s32.totalorder %s163, %s164
      %p176 = scmp.eq.s32.totalorder %s28, 1
      %p177 = por %p175, %p176
      %p179 = scmp.ne.s32.totalorder %s164, %s178
      %p180 = scmp.eq.s32.totalorder %s28, 0
      %p181 = por %p179, %p180
      %s182 = ssub.s32 %s22, %s29
      %p183 = scmp.eq.s32.totalorder %s182, 0
      %s185 = sadd.s32 %s184, 1
      %s186 = scalar_select %p183, %s184, %s185
      %p189 = pneg %p183
      %p190 = scmp.eq.s32.totalorder %s22, 1
      %p191 = por %p189, %p190
      %p192 = scmp.ne.s32.totalorder %s184, %s187
      %p193 = scmp.eq.s32.totalorder %s22, 0
      %p194 = por %p192, %p193
      %p195 = scmp.ne.s32.totalorder %s184, %s187
      %p196 = scmp.eq.s32.totalorder %s27, 1
      %p197 = por %p195, %p196
      %p198 = scmp.ne.s32.totalorder %s187, %s188
      %p199 = scmp.eq.s32.totalorder %s27, 0
      %p200 = por %p198, %p199
      %p201 = scmp.ne.s32.totalorder %s187, %s188
      %p202 = scmp.eq.s32.totalorder %s28, 1
      %p203 = por %p201, %p202
      %p205 = scmp.ne.s32.totalorder %s188, %s204
      %p206 = scmp.eq.s32.totalorder %s28, 0
      %p207 = por %p205, %p206
      %p208 = scmp.le.s32.totalorder 1, %s22
      %p209 = scmp.lt.s32.totalorder %s22, 3
      %p210 = pnand %p208, %p209
      %p211 = pneg %p210
      // Predicated region
      $region9: #{tpu_custom_call.1} parent=5 // pred_check
        _
      $region10: #{tpu_custom_call.1} parent=5 // pred_check_branch
        %213 = sbr.rel (%p210) target = $region12
      $region11: #{tpu_custom_call.1} parent=5 // pred_region
        %s214 = ssub.s32 %s22, 1
        // Predicated region
        $region13: #{tpu_custom_call.1} parent=11 // pred_check
          %p215 = pneg %p69
        $region14: #{tpu_custom_call.1} parent=11 // pred_check_branch
          %217 = sbr.rel (%p215) target = $region16
        $region15: #{tpu_custom_call.1} parent=11 // pred_region
          %219 = vsyncadd [#allocation7], 0
          %s220 = sshll.u32 %s1, 4
          %s221 = int_to_ptr.hbm [resolvable:$true] %s220
          %s222 = sshll.u32 [#allocation6], 4
          %s223 = int_to_ptr.vmem [resolvable:$true] %s222
          %228 = dma.hbm_to_vmem [thread:$0]  %s221, 1024, %s223, [#allocation7], 64, 64, 4
        $region16: #{tpu_custom_call.1} parent=11 // pred_fallthru
          _
        // Predicated region
        $region17: #{tpu_custom_call.1} parent=11 // pred_check
          %p229 = pneg %p90
        $region18: #{tpu_custom_call.1} parent=11 // pred_check_branch
          %231 = sbr.rel (%p229) target = $region20
        $region19: #{tpu_custom_call.1} parent=11 // pred_region
          _
        $region20: #{tpu_custom_call.1} parent=11 // pred_fallthru
          _
        // Predicated region
        $region21: #{tpu_custom_call.1} parent=11 // pred_check
          %p232 = pneg %p111
        $region22: #{tpu_custom_call.1} parent=11 // pred_check_branch
          %234 = sbr.rel (%p232) target = $region24
        $region23: #{tpu_custom_call.1} parent=11 // pred_region
          %236 = vsyncadd [#allocation7], 0
          %s237 = sshll.u32 %s3, 4
          %s238 = int_to_ptr.hbm [resolvable:$true] %s237
          %s239 = sshll.u32 [#allocation8], 4
          %s240 = int_to_ptr.vmem [resolvable:$true] %s239
          %245 = dma.hbm_to_vmem [thread:$0]  %s238, 1024, %s240, [#allocation7], 64, 64, 4
        $region24: #{tpu_custom_call.1} parent=11 // pred_fallthru
          _
        // Predicated region
        $region25: #{tpu_custom_call.1} parent=11 // pred_check
          %p246 = pneg %p132
        $region26: #{tpu_custom_call.1} parent=11 // pred_check_branch
          %248 = sbr.rel (%p246) target = $region28
        $region27: #{tpu_custom_call.1} parent=11 // pred_region
          _
        $region28: #{tpu_custom_call.1} parent=11 // pred_fallthru
          _
        // Predicated region
        $region29: #{tpu_custom_call.1} parent=11 // pred_check
          %p249 = pneg %p153
        $region30: #{tpu_custom_call.1} parent=11 // pred_check_branch
          %251 = sbr.rel (%p249) target = $region32
        $region31: #{tpu_custom_call.1} parent=11 // pred_region
          _
        $region32: #{tpu_custom_call.1} parent=11 // pred_fallthru
          _
        // Predicated region
        $region33: #{tpu_custom_call.1} parent=11 // pred_check
          %p252 = pneg %p174
        $region34: #{tpu_custom_call.1} parent=11 // pred_check_branch
          %254 = sbr.rel (%p252) target = $region36
        $region35: #{tpu_custom_call.1} parent=11 // pred_region
          _
        $region36: #{tpu_custom_call.1} parent=11 // pred_fallthru
          _
      $region12: #{tpu_custom_call.1} parent=5 // pred_fallthru
        _
      %p255 = scmp.lt.s32.totalorder %s22, 2
      // Predicated region
      $region37: #{tpu_custom_call.1} parent=5 // pred_check
        %p256 = pneg %p255
      $region38: #{tpu_custom_call.1} parent=5 // pred_check_branch
        %258 = sbr.rel (%p256) target = $region40
      $region39: #{tpu_custom_call.1} parent=5 // pred_region
        // Predicated region
        $region41: #{tpu_custom_call.1} parent=39 // pred_check
          %p259 = pneg %p42
        $region42: #{tpu_custom_call.1} parent=39 // pred_check_branch
          %261 = sbr.rel (%p259) target = $region44
        $region43: #{tpu_custom_call.1} parent=39 // pred_region
          %s262 = sand.u32 %s32, 1
          %s263 = scalar_lea.sflag [#allocation4], %s262
          %s264 = sand.u32 %s32, 1
          %s265 = smul.addr %s264, 16
          %s266 = scalar_lea.vmem [#allocation3], %s265
          %s267 = smul.u32 2, %s22
          %269 = vsyncadd %s263, 0
          %s270 = smul.addr %s267, 8
          %s271 = scalar_lea.hbm %s0, %s270
          %s272 = sshll.u32 %s271, 4
          %s273 = int_to_ptr.hbm [resolvable:$true] %s272
          %s274 = sshll.u32 %s266, 4
          %s275 = int_to_ptr.vmem [resolvable:$true] %s274
          %280 = dma.hbm_to_vmem [thread:$0]  %s273, 256, %s275, %s263, 128, 128, 8
        $region44: #{tpu_custom_call.1} parent=39 // pred_fallthru
          _
      $region40: #{tpu_custom_call.1} parent=5 // pred_fallthru
        _
      %p281 = scmp.le.s32.totalorder 1, %s22
      %p282 = scmp.lt.s32.totalorder %s22, 3
      %p283 = pnand %p281, %p282
      %p284 = pneg %p283
      // Predicated region
      $region45: #{tpu_custom_call.1} parent=5 // pred_check
        _
      $region46: #{tpu_custom_call.1} parent=5 // pred_check_branch
        %286 = sbr.rel (%p283) target = $region48
      $region47: #{tpu_custom_call.1} parent=5 // pred_region
        %s287 = ssub.s32 %s22, 1
        %s288 = sand.u32 %s35, 1
        %s289 = scalar_lea.sflag [#allocation4], %s288
        %s290 = sand.u32 %s35, 1
        %s291 = smul.addr %s290, 16
        %s292 = scalar_lea.vmem [#allocation3], %s291
        // Predicated region
        $region49: #{tpu_custom_call.1} parent=47 // pred_check
          %p293 = pneg %p48
        $region50: #{tpu_custom_call.1} parent=47 // pred_check_branch
          %295 = sbr.rel (%p293) target = $region52
        $region51: #{tpu_custom_call.1} parent=47 // pred_region
          %297 = dma.done %s289, 256
        $region52: #{tpu_custom_call.1} parent=47 // pred_fallthru
          _
        // Predicated region
        $region53: #{tpu_custom_call.1} parent=47 // pred_check
          %p298 = pneg %p69
        $region54: #{tpu_custom_call.1} parent=47 // pred_check_branch
          %300 = sbr.rel (%p298) target = $region56
        $region55: #{tpu_custom_call.1} parent=47 // pred_region
          %302 = dma.done [#allocation7], 1024
        $region56: #{tpu_custom_call.1} parent=47 // pred_fallthru
          _
        // Predicated region
        $region57: #{tpu_custom_call.1} parent=47 // pred_check
          %p303 = pneg %p111
        $region58: #{tpu_custom_call.1} parent=47 // pred_check_branch
          %305 = sbr.rel (%p303) target = $region60
        $region59: #{tpu_custom_call.1} parent=47 // pred_region
          %307 = dma.done [#allocation7], 1024
        $region60: #{tpu_custom_call.1} parent=47 // pred_fallthru
          _
        %s308 = sand.u32 %s35, 1
        %s309 = scalar_lea.sflag [#allocation4], %s308
        %s310 = sand.u32 %s35, 1
        %s311 = smul.addr %s310, 16
        %s312 = scalar_lea.vmem [#allocation3], %s311
        %p313 = pneg %p48
        %p314 = pneg %p45
        %p315 = pneg %p69
        %p316 = pneg %p66
        %p317 = pneg %p90
        %p318 = pneg %p87
        %p319 = pneg %p111
        %p320 = pneg %p108
        %p321 = pneg %p132
        %p322 = pneg %p129
        %p323 = pneg %p153
        %p324 = pneg %p150
        %p325 = pneg %p174
        %p326 = pneg %p171
        %p327 = pneg %p200
        %p328 = pneg %p197
        %s329 = sand.u32 %s187, 1
        %s330 = scalar_lea.sflag [#allocation5], %s329
        %s331 = sand.u32 %s187, 1
        %s332 = scalar_lea.vmem [#allocation9], %s331
        %s333 = smul.u32 2, %s27
        %v335 = vld [vmem:[%s292] sm:$0xff]
        %v336 = vld [vmem:[%s292 + $0x8] sm:$0xff]
        %v337 = vpack.c.bf16 %v336, %v335
        %v338 = vld [vmem:[#allocation6] sm:$0xf]
        %v339 = vld [vmem:[#allocation6 + $0x4] sm:$0xf]
        %v340 = vld [vmem:[#allocation6 + $0x8] sm:$0xf]
        %v341 = vld [vmem:[#allocation6 + $0xc] sm:$0xf]
        %v342 = vld [vmem:[#allocation6 + $0x10] sm:$0xf]
        %v343 = vld [vmem:[#allocation6 + $0x14] sm:$0xf]
        %v344 = vld [vmem:[#allocation6 + $0x18] sm:$0xf]
        %v345 = vld [vmem:[#allocation6 + $0x1c] sm:$0xf]
        %v346 = vld [vmem:[#allocation6 + $0x20] sm:$0xf]
        %v347 = vld [vmem:[#allocation6 + $0x24] sm:$0xf]
        %v348 = vld [vmem:[#allocation6 + $0x28] sm:$0xf]
        %v349 = vld [vmem:[#allocation6 + $0x2c] sm:$0xf]
        %v350 = vld [vmem:[#allocation6 + $0x30] sm:$0xf]
        %v351 = vld [vmem:[#allocation6 + $0x34] sm:$0xf]
        %v352 = vld [vmem:[#allocation6 + $0x38] sm:$0xf]
        %v353 = vld [vmem:[#allocation6 + $0x3c] sm:$0xf]
        %v354 = vld [vmem:[%s2] sm:$0x1]
        %v356 = vperm.slane %v354, 0
        %v374 = vunpack.c.l.b16 %v338
        %v375 = vunpack.c.l.b16 %v339
        %v376 = vunpack.c.l.b16 %v340
        %v377 = vunpack.c.l.b16 %v341
        %v378 = vunpack.c.l.b16 %v342
        %v379 = vunpack.c.l.b16 %v343
        %v380 = vunpack.c.l.b16 %v344
        %v381 = vunpack.c.l.b16 %v345
        %v382 = vunpack.c.l.b16 %v346
        %v383 = vunpack.c.l.b16 %v347
        %v384 = vunpack.c.l.b16 %v348
        %v385 = vunpack.c.l.b16 %v349
        %v386 = vunpack.c.l.b16 %v350
        %v387 = vunpack.c.l.b16 %v351
        %v388 = vunpack.c.l.b16 %v352
        %v389 = vunpack.c.l.b16 %v353
        %v390 = vpack.c.b16 %v375, %v374
        %v391 = vpack.c.b16 %v377, %v376
        %v392 = vpack.c.b16 %v379, %v378
        %v393 = vpack.c.b16 %v381, %v380
        %v394 = vpack.c.b16 %v383, %v382
        %v395 = vpack.c.b16 %v385, %v384
        %v396 = vpack.c.b16 %v387, %v386
        %v397 = vpack.c.b16 %v389, %v388
        %406 = vmatpush.bf16.msra.mxu0 %v397
        %407 = vmatpush.bf16.msra.mxu0 %v396
        %408 = vmatpush.bf16.msra.mxu0 %v395
        %409 = vmatpush.bf16.msra.mxu0 %v394
        %410 = vmatpush.bf16.msra.mxu0 %v393
        %411 = vmatpush.bf16.msra.mxu0 %v392
        %412 = vmatpush.bf16.msra.mxu0 %v391
        %413 = vmatpush.bf16.msra.mxu0 %v390
        %414 = vmatmul.bf16.gmra.mxu0 %v337
        %v415 = vpop.f32.mrf.mxu0
        %v416 = vadd.f32 %v356, %v415
        %v417 = vpop.f32.mrf.mxu0
        %v418 = vadd.f32 %v356, %v417
        %419 = vdwg.mxu0
        %v420 = vmax.f32 %v416, 0.0
        %v421 = vmax.f32 %v418, 0.0
        %v422 = vpack.c.bf16 %v421, %v420
        %v423 = vld [vmem:[#allocation8] sm:$0xf]
        %v424 = vld [vmem:[#allocation8 + $0x4] sm:$0xf]
        %v425 = vld [vmem:[#allocation8 + $0x8] sm:$0xf]
        %v426 = vld [vmem:[#allocation8 + $0xc] sm:$0xf]
        %v427 = vld [vmem:[#allocation8 + $0x10] sm:$0xf]
        %v428 = vld [vmem:[#allocation8 + $0x14] sm:$0xf]
        %v429 = vld [vmem:[#allocation8 + $0x18] sm:$0xf]
        %v430 = vld [vmem:[#allocation8 + $0x1c] sm:$0xf]
        %v431 = vld [vmem:[#allocation8 + $0x20] sm:$0xf]
        %v432 = vld [vmem:[#allocation8 + $0x24] sm:$0xf]
        %v433 = vld [vmem:[#allocation8 + $0x28] sm:$0xf]
        %v434 = vld [vmem:[#allocation8 + $0x2c] sm:$0xf]
        %v435 = vld [vmem:[#allocation8 + $0x30] sm:$0xf]
        %v436 = vld [vmem:[#allocation8 + $0x34] sm:$0xf]
        %v437 = vld [vmem:[#allocation8 + $0x38] sm:$0xf]
        %v438 = vld [vmem:[#allocation8 + $0x3c] sm:$0xf]
        %v439 = vld [vmem:[%s4] sm:$0x1]
        %v441 = vperm.slane %v439, 0
        %v459 = vunpack.c.l.b16 %v423
        %v460 = vunpack.c.l.b16 %v424
        %v461 = vunpack.c.l.b16 %v425
        %v462 = vunpack.c.l.b16 %v426
        %v463 = vunpack.c.l.b16 %v427
        %v464 = vunpack.c.l.b16 %v428
        %v465 = vunpack.c.l.b16 %v429
        %v466 = vunpack.c.l.b16 %v430
        %v467 = vunpack.c.l.b16 %v431
        %v468 = vunpack.c.l.b16 %v432
        %v469 = vunpack.c.l.b16 %v433
        %v470 = vunpack.c.l.b16 %v434
        %v471 = vunpack.c.l.b16 %v435
        %v472 = vunpack.c.l.b16 %v436
        %v473 = vunpack.c.l.b16 %v437
        %v474 = vunpack.c.l.b16 %v438
        %v475 = vpack.c.b16 %v460, %v459
        %v476 = vpack.c.b16 %v462, %v461
        %v477 = vpack.c.b16 %v464, %v463
        %v478 = vpack.c.b16 %v466, %v465
        %v479 = vpack.c.b16 %v468, %v467
        %v480 = vpack.c.b16 %v470, %v469
        %v481 = vpack.c.b16 %v472, %v471
        %v482 = vpack.c.b16 %v474, %v473
        %491 = vmatpush.bf16.msra.mxu0 %v482
        %492 = vmatpush.bf16.msra.mxu0 %v481
        %493 = vmatpush.bf16.msra.mxu0 %v480
        %494 = vmatpush.bf16.msra.mxu0 %v479
        %495 = vmatpush.bf16.msra.mxu0 %v478
        %496 = vmatpush.bf16.msra.mxu0 %v477
        %497 = vmatpush.bf16.msra.mxu0 %v476
        %498 = vmatpush.bf16.msra.mxu0 %v475
        %499 = vmatmul.bf16.gmra.mxu0 %v422
        %v500 = vpop.f32.mrf.mxu0
        %v501 = vadd.f32 %v441, %v500
        %v502 = vpop.f32.mrf.mxu0
        %v503 = vadd.f32 %v441, %v502
        %504 = vdwg.mxu0
        %v505 = vmax.f32 %v501, 0.0
        %v506 = vmax.f32 %v503, 0.0
        %v507 = vld [vmem:[%s5] sm:$0xf]
        %v508 = vpack.c.bf16 %v506, %v505
        %509 = vmatpush.bf16.xpose.msra.mxu0 0
        %510 = vmatpush.bf16.xpose.msra.mxu0 0
        %511 = vmatpush.bf16.xpose.msra.mxu0 0
        %512 = vmatpush.bf16.xpose.msra.mxu0 0
        %513 = vmatpush.bf16.xpose.msra.mxu0 0
        %514 = vmatpush.bf16.xpose.msra.mxu0 0
        %515 = vmatpush.bf16.xpose.msra.mxu0 0
        %516 = vmatpush.bf16.xpose.msra.mxu0 %v508
        %517 = vmatmul.bf16.gmra.mxu0 %v507
        %v518 = vpop.f32.mrf.mxu0
        %v519 = vadd.f32 0.0, %v518
        %v520 = vpop.f32.mrf.mxu0
        %521 = vdwg.mxu0
        %v522 = vld [vmem:[#allocation2] sm:$0x1]
        %524 = vset.pattern.permute.xlu0 0
        %525 = vperm.xlu0 %524, %v522
        %v526 = vpop.permute.xlu0 %525
        %v528 = vperm.slane %v526, 0
        %v529 = vadd.f32 %v519, %v528
        %vm530 = vcmask 122880
        %531 = vst.msk [vmem:[%s332] sm:$0x1] %vm530, %v529
        %s532 = sand.u32 %s187, 1
        %s533 = scalar_lea.sflag [#allocation5], %s532
        %s534 = sand.u32 %s187, 1
        %s535 = scalar_lea.vmem [#allocation9], %s534
        // Predicated region
        $region61: #{tpu_custom_call.1} parent=47 // pred_check
          %p536 = pneg %p197
        $region62: #{tpu_custom_call.1} parent=47 // pred_check_branch
          %538 = sbr.rel (%p536) target = $region64
        $region63: #{tpu_custom_call.1} parent=47 // pred_region
          %540 = vsyncadd %s533, 0
          %s541 = scalar_lea.hbm %s7, %s27
          %s543 = sshll.u32 %s535, 4
          %s544 = int_to_ptr.vmem [resolvable:$true] %s543
          %s545 = sshll.u32 %s541, 4
          %s546 = int_to_ptr.hbm [resolvable:$true] %s545
          %548 = dma.vmem_to_hbm [thread:$0]  %s544, 16, %s546, %s533
        $region64: #{tpu_custom_call.1} parent=47 // pred_fallthru
          _
      $region48: #{tpu_custom_call.1} parent=5 // pred_fallthru
        _
      %p549 = scmp.le.s32.totalorder 2, %s22
      // Predicated region
      $region65: #{tpu_custom_call.1} parent=5 // pred_check
        %p550 = pneg %p549
      $region66: #{tpu_custom_call.1} parent=5 // pred_check_branch
        %552 = sbr.rel (%p550) target = $region68
      $region67: #{tpu_custom_call.1} parent=5 // pred_region
        %s553 = ssub.s32 %s22, 2
        // Predicated region
        $region69: #{tpu_custom_call.1} parent=67 // pred_check
          %p554 = pneg %p203
        $region70: #{tpu_custom_call.1} parent=67 // pred_check_branch
          %556 = sbr.rel (%p554) target = $region72
        $region71: #{tpu_custom_call.1} parent=67 // pred_region
          %s557 = sand.u32 %s188, 1
          %s558 = scalar_lea.sflag [#allocation5], %s557
          %s559 = sand.u32 %s188, 1
          %s560 = scalar_lea.vmem [#allocation9], %s559
          %562 = dma.done %s558, 16
        $region72: #{tpu_custom_call.1} parent=67 // pred_fallthru
          _
      $region68: #{tpu_custom_call.1} parent=5 // pred_fallthru
        _
    $region6: #{tpu_custom_call.1} parent=1 // loop_footer
      %s26 = sadd.s32 1, %s22
    $region7: #{tpu_custom_call.1} parent=1 // loop_footer_branch
      %21 = sbr.rel target = $region3
    $region8: #{tpu_custom_call.1} parent=1 // loop_exit
      _
    %563 = vsyncpa [#allocation4], 1
    %s564 = scalar_lea.sflag [#allocation4], 1
    %565 = vsyncpa %s564, 1
    %566 = vsyncpa [#allocation7], 1
    %567 = vsyncpa [#allocation5], 1
    %s568 = scalar_lea.sflag [#allocation5], 1
    %569 = vsyncpa %s568, 1

</llo_original>
